<compile_context>
chip_gen: v5e
topology: v5e:2x2
jax: 0.10.0
libtpu: 0.0.40
codegen_flags: <defaults>
</compile_context>

<pallas_src>
import functools
import math

import jax
import jax.numpy as jnp
from jax import lax
from jax.experimental import pallas as pl
from jax.experimental.pallas import tpu as pltpu


def _round_up(x, m):
    return ((x + m - 1) // m) * m


def _cdiv(a, b):
    return (a + b - 1) // b


# ---------------------------------------------------------------------------
# Path 1: small table, copied once into VMEM, gather via one-hot MXU matmul.
# ---------------------------------------------------------------------------
def _onehot_embed_kernel(ids_ref, table_hbm, out_ref, table_vmem, sem, *,
                         scale, v_chunk):
    # ids_ref   : (T, 1) int32 token ids for this tile (VMEM block)
    # table_hbm : (V, D) embedding table left in HBM (memory_space=pl.ANY)
    # out_ref   : (T, D) output tile
    # table_vmem: (V, D) single-buffered VMEM copy of the table (scratch)
    # sem       : (1,) DMA semaphore for the one-time table copy
    T = out_ref.shape[0]
    V, D = table_vmem.shape

    # Copy the table HBM -> VMEM once per core slice (first sequential step of
    # the "arbitrary" axis).  Scratch persists across grid iterations, so the
    # table is resident and single-buffered for the rest of the slice.
    @pl.when(pl.program_id(1) == 0)
    def _():
        cp = pltpu.make_async_copy(table_hbm, table_vmem, sem.at[0])
        cp.start()
        cp.wait()

    ids = ids_ref[...]                                   # (T, 1) int32
    acc = jnp.zeros((T, D), jnp.float32)
    # Vocab-chunked one-hot: bounds the (T, v_chunk) live temporary instead of
    # materializing a full (T, V) one-hot.  One-hot stays in the table dtype
    # (exact 0/1, avoids f32 multi-pass MXU operands for bf16 tables).
    for start in range(0, V, v_chunk):
        size = min(v_chunk, V - start)
        onehot = (ids == (start + lax.broadcasted_iota(jnp.int32, (T, size), 1))
                  ).astype(table_vmem.dtype)
        acc = acc + jnp.dot(onehot, table_vmem[pl.ds(start, size), :],
                            preferred_element_type=jnp.float32)
    out_ref[...] = (acc * scale).astype(out_ref.dtype)


def _embed_small_table(flat_ids, table, T, scale, num_core_slices, vocab_chunk):
    n = flat_ids.shape[0]
    V, D = table.shape
    itemsize = table.dtype.itemsize
    n_tiles = _cdiv(n, T)
    NC = max(1, min(int(num_core_slices), n_tiles))
    J = _cdiv(n_tiles, NC)
    padded_n = NC * J * T
    if padded_n != n:
        flat_ids = jnp.concatenate(
            [flat_ids, jnp.zeros((padded_n - n,), jnp.int32)])
    ids2d = flat_ids.reshape(padded_n, 1)

    vc = max(8, min(int(vocab_chunk), V))
    table_bytes = V * D * itemsize
    need = (table_bytes                 # single-buffered resident table
            + 2 * T * D * itemsize      # double-buffered output blocks
            + 2 * T * 4                 # double-buffered id blocks
            + T * vc * 4 + T * D * 4    # one-hot chunk + f32 accumulator
            + (2 << 20))                # slack
    vmem_limit = int(min(96 << 20, max(32 << 20, need)))

    kernel = functools.partial(_onehot_embed_kernel, scale=scale, v_chunk=vc)
    return pl.pallas_call(
        kernel,
        out_shape=jax.ShapeDtypeStruct((padded_n, D), table.dtype),
        grid=(NC, J),
        in_specs=[
            pl.BlockSpec((T, 1), lambda c, j: (c * J + j, 0)),
            pl.BlockSpec(memory_space=pl.ANY),   # table stays in HBM
        ],
        out_specs=pl.BlockSpec((T, D), lambda c, j: (c * J + j, 0)),
        scratch_shapes=[
            pltpu.VMEM((V, D), table.dtype),
            pltpu.SemaphoreType.DMA((1,)),
        ],
        compiler_params=pltpu.CompilerParams(
            dimension_semantics=("parallel", "arbitrary"),
            vmem_limit_bytes=vmem_limit),
    )(ids2d, table)


# ---------------------------------------------------------------------------
# Path 2: HBM-resident table, manual double-buffered per-row DMA gather.
# ---------------------------------------------------------------------------
def _dma_gather_embed_kernel(ids_ref, table_hbm, out_ref, gather_buf, sems, *,
                             tokens_per_tile, tiles_per_slice, scale):
    # ids_ref   : (padded_n,) int32 token ids in SMEM (scalar prefetch)
    # table_hbm : (V, D) embedding table, left in HBM (memory_space=pl.ANY)
    # out_ref   : (T, D) output tile
    # gather_buf: (2, T, D) VMEM double buffer of gathered rows
    # sems      : (2,) DMA semaphores, one per buffer slot
    T = tokens_per_tile
    J = tiles_per_slice
    c = pl.program_id(0)          # "parallel" core-slice axis
    j = pl.program_id(1)          # "arbitrary" (sequential) tile axis
    slot = j % 2

    def start_tile_gather(tile_idx, buf_slot):
        base = pl.multiple_of(tile_idx * T, 16)

        def issue_row(t, carry):
            tok = ids_ref[base + t]
            pltpu.make_async_copy(
                table_hbm.at[pl.ds(tok, 1), :],
                gather_buf.at[buf_slot, pl.ds(t, 1), :],
                sems.at[buf_slot],
            ).start()
            return carry

        # Unrolled issue loop: descriptor issue (scalar + misc slots) is the
        # binding resource for tiny 512 B row copies, not HBM bandwidth.
        lax.fori_loop(0, T, issue_row, None, unroll=8)

    # Prime the pipeline on the first sequential step of this core slice.
    @pl.when(j == 0)
    def _():
        start_tile_gather(c * J, 0)

    # Prefetch the next tile's rows into the other buffer slot.
    @pl.when(j + 1 < J)
    def _():
        start_tile_gather(c * J + j + 1, 1 - slot)

    # One aggregate wait for the whole tile: the T per-row copies all signal
    # sems[slot] and DMA semaphores account in bytes, so a single wait sized
    # for (T, D) matches the total signalled amount (replaces T serial waits).
    pltpu.make_async_copy(
        table_hbm.at[pl.ds(0, T), :],
        gather_buf.at[slot],
        sems.at[slot],
    ).wait()

    # sqrt(d_model) scaling rides a free VPU slot; stay in the table dtype
    # (no f32 up/down cast on the store path).
    out_ref[...] = (gather_buf[slot] * scale).astype(out_ref.dtype)


def _embed_dma_gather(flat_ids, table, T, scale, num_core_slices):
    n = flat_ids.shape[0]
    V, D = table.shape
    itemsize = table.dtype.itemsize
    # Keep the aggregate-wait dummy slice (T rows of the table) in bounds.
    if V >= 16:
        T = max(16, min(T, (V // 16) * 16))
    n_tiles = _cdiv(n, T)
    NC = max(1, min(int(num_core_slices), n_tiles))
    J = _cdiv(n_tiles, NC)
    padded_n = NC * J * T
    if padded_n != n:
        flat_ids = jnp.concatenate(
            [flat_ids, jnp.zeros((padded_n - n,), jnp.int32)])

    need = (2 * T * D * itemsize        # gather double buffer
            + 2 * T * D * itemsize      # double-buffered output blocks
            + (2 << 20))
    vmem_limit = int(min(96 << 20, max(32 << 20, need)))

    kernel = functools.partial(
        _dma_gather_embed_kernel,
        tokens_per_tile=T, tiles_per_slice=J, scale=scale)

    # TODO(synk): stream token ids per tile (blocked SMEM input) instead of
    # scalar-prefetching the whole (B*S,) id vector for very long sequences
    # (1-D SMEM arrays pad to next_pow2(4N) bytes).
    return pl.pallas_call(
        kernel,
        out_shape=jax.ShapeDtypeStruct((padded_n, D), table.dtype),
        grid_spec=pltpu.PrefetchScalarGridSpec(
            num_scalar_prefetch=1,
            grid=(NC, J),
            in_specs=[pl.BlockSpec(memory_space=pl.ANY)],   # table stays in HBM
            out_specs=pl.BlockSpec((T, D), lambda c, j, ids: (c * J + j, 0)),
            scratch_shapes=[
                pltpu.VMEM((2, T, D), table.dtype),
                pltpu.SemaphoreType.DMA((2,)),
            ],
        ),
        compiler_params=pltpu.CompilerParams(
            dimension_semantics=("parallel", "arbitrary"),
            vmem_limit_bytes=vmem_limit),
    )(flat_ids, table)


def embeddings_forward(token_ids, table, *, tokens_per_tile=None,
                       vmem_table_limit_bytes=8 * 1024 * 1024,
                       num_core_slices=1,
                       vocab_chunk=1024):
    """token_ids: (B, S) int; table: (V, D) -> (B, S, D) = table[ids]*sqrt(D).

    num_core_slices: 1 on single-TensorCore chips (v5e/v6e); 2 on v7x.
    vmem_table_limit_bytes: one-hot/DMA crossover (lower it, e.g. 4 MiB, on v5e).
    """
    B, S = token_ids.shape
    V, D = table.shape
    n = B * S
    scale = math.sqrt(float(D))
    flat_ids = token_ids.reshape(n).astype(jnp.int32)

    # TODO(synk): for repeated use with a fixed table, bake sqrt(d_model) into
    # the embedding weights once at init instead of scaling per call.
    table_bytes = V * D * table.dtype.itemsize
    small = table_bytes <= vmem_table_limit_bytes

    if tokens_per_tile is None:
        # One-hot path: 256 rows fill the 256-wide MXU on v6e/v7x (use 128 on
        # v5e).  DMA-gather path: more rows in flight hide per-row DMA latency
        # and amortize the ~0.35us/step grid overhead.
        tokens_per_tile = 256 if small else 512
    # Multiple of 16 -> sublane-dense, unmasked output stores.
    T = min(_round_up(n, 16), _round_up(int(tokens_per_tile), 16))

    if small:
        out_flat = _embed_small_table(flat_ids, table, T, scale,
                                      num_core_slices, vocab_chunk)
    else:
        out_flat = _embed_dma_gather(flat_ids, table, T, scale,
                                     num_core_slices)
    return out_flat[:n].reshape(B, S, D)


if __name__ == "__main__":
    # Small, module-consistent shapes: batch=2, seq=72, d_model=128, vocab=512.
    B, S, D, V = 2, 72, 128, 512
    key = jax.random.PRNGKey(0)
    k_ids, k_tbl = jax.random.split(key)
    token_ids = jax.random.randint(k_ids, (B, S), 0, V, dtype=jnp.int32)
    table = jax.random.normal(k_tbl, (V, D), dtype=jnp.float32)
    ref = table[token_ids] * math.sqrt(D)

    # Path 1: small table -> single-buffered VMEM table + one-hot MXU gather.
    out_small = jax.block_until_ready(
        embeddings_forward(token_ids, table, tokens_per_tile=32))
    assert out_small.shape == (B, S, D)
    assert jnp.allclose(out_small, ref, atol=1e-5, rtol=1e-5)

    # Path 2: force the HBM table + double-buffered row-DMA gather path
    # (exercises priming, cross-step prefetch, aggregate wait, padded tail).
    out_dma = jax.block_until_ready(
        embeddings_forward(token_ids, table, tokens_per_tile=32,
                           vmem_table_limit_bytes=0))
    assert out_dma.shape == (B, S, D)
    assert jnp.allclose(out_dma, ref, atol=1e-5, rtol=1e-5)

    # Path 2 with two core slices (v7x-style split; sequential on 1-TC chips).
    out_dma2 = jax.block_until_ready(
        embeddings_forward(token_ids, table, tokens_per_tile=32,
                           vmem_table_limit_bytes=0, num_core_slices=2))
    assert jnp.allclose(out_dma2, ref, atol=1e-5, rtol=1e-5)

    # Path 1 with a bf16 table: one-hot stays in bf16 (exact 0/1 MXU operands).
    table_bf16 = table.astype(jnp.bfloat16)
    ref_bf16 = table_bf16.astype(jnp.float32)[token_ids] * math.sqrt(D)
    out_bf16 = jax.block_until_ready(
        embeddings_forward(token_ids, table_bf16, tokens_per_tile=32))
    assert out_bf16.dtype == jnp.bfloat16
    assert jnp.allclose(out_bf16.astype(jnp.float32), ref_bf16,
                        rtol=5e-2, atol=5e-1)

    # Default tile size exercises the "clamp T to the token count" path.
    out_default = jax.block_until_ready(embeddings_forward(token_ids, table))
    assert jnp.allclose(out_default, ref, atol=1e-5, rtol=1e-5)

    print("KERNEL_OK")
</pallas_src>

<mosaic_0001>
module attributes {stable_mosaic.version = 11 : i64} {
  func.func @_onehot_embed_kernel(%arg0: i32, %arg1: i32, %arg2: memref<32x1xi32, #tpu.memory_space<vmem>>, %arg3: memref<512x128xf32, #tpu.memory_space<any>>, %arg4: memref<32x128xf32, #tpu.memory_space<vmem>>, %arg5: memref<512x128xf32, #tpu.memory_space<vmem>>, %arg6: memref<1x!tpu.dma_semaphore, #tpu.memory_space<semaphore_mem>>) attributes {dimension_semantics = [#tpu.dimension_semantics<parallel>, #tpu.dimension_semantics<arbitrary>], iteration_bounds = array<i64: 1, 5>, scalar_prefetch = 0 : i64, scratch_operands = 2 : i64, tpu.core_type = #tpu.core_type<tc>, window_params = [{transform_indices = @transform_0, window_bounds = array<i64: 32, 1>}, {}, {transform_indices = @transform_2, window_bounds = array<i64: 32, 128>}]} {
    %c0_i32 = arith.constant 0 : i32
    %0 = arith.cmpi eq, %arg1, %c0_i32 : i32
    %1 = arith.extui %0 : i1 to i32
    %c0_i32_0 = arith.constant 0 : i32
    %2 = arith.cmpi ne, %1, %c0_i32_0 : i32
    scf.if %2 {
      %c0_i32_9 = arith.constant 0 : i32
      %18 = tpu.memref_slice %arg6[%c0_i32_9] : memref<1x!tpu.dma_semaphore, #tpu.memory_space<semaphore_mem>> -> memref<1x!tpu.dma_semaphore, #tpu.memory_space<semaphore_mem>>
      %19 = tpu.memref_squeeze %18 : memref<1x!tpu.dma_semaphore, #tpu.memory_space<semaphore_mem>> -> memref<!tpu.dma_semaphore, #tpu.memory_space<semaphore_mem>>
      tpu.enqueue_dma source(%arg3 : memref<512x128xf32, #tpu.memory_space<any>>) target(%arg5 : memref<512x128xf32, #tpu.memory_space<vmem>>) target_semaphore(%19 : memref<!tpu.dma_semaphore, #tpu.memory_space<semaphore_mem>>)
      %c0_i32_10 = arith.constant 0 : i32
      %20 = tpu.memref_slice %arg6[%c0_i32_10] : memref<1x!tpu.dma_semaphore, #tpu.memory_space<semaphore_mem>> -> memref<1x!tpu.dma_semaphore, #tpu.memory_space<semaphore_mem>>
      %21 = tpu.memref_squeeze %20 : memref<1x!tpu.dma_semaphore, #tpu.memory_space<semaphore_mem>> -> memref<!tpu.dma_semaphore, #tpu.memory_space<semaphore_mem>>
      tpu.wait_dma2 semaphore(%21 : memref<!tpu.dma_semaphore, #tpu.memory_space<semaphore_mem>>) src(%arg3 : memref<512x128xf32, #tpu.memory_space<any>>) dst(%arg5 : memref<512x128xf32, #tpu.memory_space<vmem>>)
    } else {
    }
    %c0 = arith.constant 0 : index
    %c0_1 = arith.constant 0 : index
    %3 = vector.load %arg2[%c0, %c0_1] : memref<32x1xi32, #tpu.memory_space<vmem>>, vector<32x1xi32>
    %cst = arith.constant 0.000000e+00 : f32
    %4 = vector.broadcast %cst : f32 to vector<32x128xf32>
    %5 = tpu.iota {dimensions = array<i32: 1>} : vector<32x512xi32>
    %c0_i32_2 = arith.constant 0 : i32
    %6 = vector.broadcast %c0_i32_2 : i32 to vector<32x512xi32>
    %7 = arith.addi %6, %5 : vector<32x512xi32>
    %8 = vector.broadcast %3 : vector<32x1xi32> to vector<32x512xi32>
    %9 = arith.cmpi eq, %8, %7 : vector<32x512xi32>
    %10 = arith.extui %9 : vector<32x512xi1> to vector<32x512xi32>
    %11 = arith.sitofp %10 : vector<32x512xi32> to vector<32x512xf32>
    %c0_3 = arith.constant 0 : index
    %c0_4 = arith.constant 0 : index
    %12 = vector.load %arg5[%c0_3, %c0_4] : memref<512x128xf32, #tpu.memory_space<vmem>>, vector<512x128xf32>
    %cst_5 = arith.constant dense<0.000000e+00> : vector<32x128xf32>
    %13 = tpu.matmul %11, %12, %cst_5 {dimension_numbers = #tpu.dot_dimension_numbers<[1], [0], [0], [1], [0, 0, 1, 1], [], []>} : vector<32x512xf32>, vector<512x128xf32>, vector<32x128xf32> -> vector<32x128xf32>
    %14 = arith.addf %4, %13 : vector<32x128xf32>
    %cst_6 = arith.constant 11.3137083 : f32
    %15 = vector.broadcast %cst_6 : f32 to vector<32x128xf32>
    %16 = arith.mulf %14, %15 : vector<32x128xf32>
    %c0_7 = arith.constant 0 : index
    %c0_8 = arith.constant 0 : index
    %17 = vector.load %arg4[%c0_7, %c0_8] : memref<32x128xf32, #tpu.memory_space<vmem>>, vector<32x128xf32>
    tpu.vector_store %arg4[%c0_7, %c0_8], %16 {strides = array<i32>} : memref<32x128xf32, #tpu.memory_space<vmem>>, vector<32x128xf32>,
    return
  }
  func.func @transform_0(%arg0: i32, %arg1: i32) -> (i32, i32) {
    %c5_i32 = arith.constant 5 : i32
    %0 = arith.muli %arg0, %c5_i32 : i32
    %1 = arith.addi %0, %arg1 : i32
    %c0_i32 = arith.constant 0 : i32
    %c0_i32_0 = arith.constant 0 : i32
    return %1, %c0_i32 : i32, i32
  }
  func.func @transform_2(%arg0: i32, %arg1: i32) -> (i32, i32) {
    %c5_i32 = arith.constant 5 : i32
    %0 = arith.muli %arg0, %c5_i32 : i32
    %1 = arith.addi %0, %arg1 : i32
    %c0_i32 = arith.constant 0 : i32
    %c0_i32_0 = arith.constant 0 : i32
    return %1, %c0_i32 : i32, i32
  }
}

</mosaic_0001>

<llo_original>
// kernel: tpu_custom_call.1
$region0: #{tpu_custom_call.1}
  #allocation0 [shape = 'u32[]', space=smem, size = 0x4, offset = 0x4, fixed_abs, tag = 'smem constant byte address 0x4 - core index']
  #allocation1 [shape = 'u32[72,128]{1,0:T(1,128)}', space=vmem, size = 0x9000, scoped, tag = 'internal scratch']
  #allocation2 [shape = 'f32[512,128]{1,0:T(8,128)}', space=vmem, size = 0x40000, scoped, tag = 'scratch operand']
  #allocation3 [shape = 's32[1]{0}', space=sflag, size = 0x4, scoped, tag = 'scratch operand']
  #allocation6 [shape = 's32[]', space=sflag, size = 0x4, offset = 0, fixed_abs, tag = 'sflag constant byte address 0x0 - dummy sync flag']
  #allocation7 [shape = 's32[]', space=sflag, size = 0x4, offset = 0, fixed_abs, tag = 'sflag constant byte address 0x0 - dummy sync flag']
  #allocation8 [shape = 'u32[]', space=smem, size = 0x4, offset = 0x44, fixed_abs, tag = 'smem constant byte address 0x44 - assertion arg 0']
  #allocation9 [shape = 'u32[]', space=smem, size = 0x4, offset = 0x48, fixed_abs, tag = 'smem constant byte address 0x48 - assertion arg 1']
  %s0 = inlined_call_operand.vmem [shape: s32[160,1], index: 0, kind: input, shape index: {}]
  %s1 = inlined_call_operand.hbm [shape: f32[512,128], index: 1, kind: input, shape index: {}]
  %s2 = inlined_call_operand.hbm [shape: f32[160,128], index: 2, kind: output, shape index: {}]
  %s3 = sld [smem:[#allocation0]]
  $region45: #{tpu_custom_call.1} parent=0
    _
  %s5 = ssub.s32 1, %s3
  %s6 = scalar_select 0, %s5, %s3
  $region1: #{tpu_custom_call.1} parent=0
    #allocation4 [shape = 'u8[32768]{0}', space=vmem, size = 0x8000, scoped, tag = 'output window, operand 0']
    #allocation5 [shape = 's32[2]{0}', space=sflag, size = 0x8, scoped, tag = 'scoped memory for tpu_custom_call.1']
    %7 = vsyncpa [#allocation5], 0
    %s8 = scalar_lea.sflag [#allocation5], 1
    %9 = vsyncpa %s8, 0
    loop: start=0, step=1, limit=7
    $region2: #{tpu_custom_call.1} parent=1 // loop_pre_header
      _
    $region3: #{tpu_custom_call.1} parent=1 // loop_header
      %s11 = sphi 0, %s15
      %p12 = scmp.ge.s32.totalorder %s11, 7
      %s18 = sphi 0, %s30
      %s19 = sphi 0, %s26
      %s20 = sphi 0, %s18
      %s21 = sphi 0, %s19
      %s22 = sphi 0, %s20
      %s23 = sphi 0, %s21
      %s37 = sphi 0, %s39
      %s40 = sphi 0, %s37
      %s41 = sphi 0, %s40
      %s57 = sphi 0, %s41
      %s67 = sphi 0, %s69
      %s70 = sphi 0, %s67
      %s71 = sphi 0, %s70
      %s87 = sphi 0, %s71
    $region4: #{tpu_custom_call.1} parent=1 // loop_header_branch
      %14 = sbr.rel (%p12) target = $region8
    $region5: #{tpu_custom_call.1} parent=1 // loop_body
      %s16 = ssub.s32 %s11, 1
      %s17 = ssub.s32 %s11, 2
      %s24 = sadd.s32 1, %s19
      %p25 = scmp.ge.s32.totalorder %s24, 5
      %s26 = scalar_select %p25, 0, %s24
      %s27 = sadd.s32 1, %s18
      %s28 = scalar_select %p25, %s27, %s18
      %p29 = scmp.ge.s32.totalorder %s28, 1
      %s30 = scalar_select %p29, 0, %s28
      %s31 = smul.u32 %s18, 5
      %s32 = sadd.s32 %s31, %s19
      %s33 = smul.u32 %s30, 5
      %s34 = sadd.s32 %s33, %s26
      %s35 = ssub.s32 %s32, %s34
      %p36 = scmp.eq.s32.totalorder %s35, 0
      %s38 = sadd.s32 %s37, 1
      %s39 = scalar_select %p36, %s37, %s38
      %p42 = pneg %p36
      %p43 = scmp.eq.s32.totalorder %s11, 4
      %p44 = por %p42, %p43
      %p45 = scmp.ne.s32.totalorder %s37, %s40
      %p46 = scmp.eq.s32.totalorder %s11, 0
      %p47 = por %p45, %p46
      %p48 = scmp.ne.s32.totalorder %s37, %s40
      %p49 = scmp.eq.s32.totalorder %s16, 4
      %p50 = por %p48, %p49
      %p51 = scmp.ne.s32.totalorder %s40, %s41
      %p52 = scmp.eq.s32.totalorder %s16, 0
      %p53 = por %p51, %p52
      %p54 = scmp.ne.s32.totalorder %s40, %s41
      %p55 = scmp.eq.s32.totalorder %s17, 4
      %p56 = por %p54, %p55
      %p58 = scmp.ne.s32.totalorder %s41, %s57
      %p59 = scmp.eq.s32.totalorder %s17, 0
      %p60 = por %p58, %p59
      %s61 = smul.u32 %s18, 5
      %s62 = sadd.s32 %s61, %s19
      %s63 = smul.u32 %s30, 5
      %s64 = sadd.s32 %s63, %s26
      %s65 = ssub.s32 %s62, %s64
      %p66 = scmp.eq.s32.totalorder %s65, 0
      %s68 = sadd.s32 %s67, 1
      %s69 = scalar_select %p66, %s67, %s68
      %p72 = pneg %p66
      %p73 = scmp.eq.s32.totalorder %s11, 4
      %p74 = por %p72, %p73
      %p75 = scmp.ne.s32.totalorder %s67, %s70
      %p76 = scmp.eq.s32.totalorder %s11, 0
      %p77 = por %p75, %p76
      %p78 = scmp.ne.s32.totalorder %s67, %s70
      %p79 = scmp.eq.s32.totalorder %s16, 4
      %p80 = por %p78, %p79
      %p81 = scmp.ne.s32.totalorder %s70, %s71
      %p82 = scmp.eq.s32.totalorder %s16, 0
      %p83 = por %p81, %p82
      %p84 = scmp.ne.s32.totalorder %s70, %s71
      %p85 = scmp.eq.s32.totalorder %s17, 4
      %p86 = por %p84, %p85
      %p88 = scmp.ne.s32.totalorder %s71, %s87
      %p89 = scmp.eq.s32.totalorder %s17, 0
      %p90 = por %p88, %p89
      %p91 = scmp.le.s32.totalorder 1, %s11
      %p92 = scmp.lt.s32.totalorder %s11, 6
      %p93 = pnand %p91, %p92
      %p94 = pneg %p93
      // Predicated region
      $region9: #{tpu_custom_call.1} parent=5 // pred_check
        _
      $region10: #{tpu_custom_call.1} parent=5 // pred_check_branch
        %96 = sbr.rel (%p93) target = $region12
      $region11: #{tpu_custom_call.1} parent=5 // pred_region
        %s97 = ssub.s32 %s11, 1
      $region12: #{tpu_custom_call.1} parent=5 // pred_fallthru
        _
      %p98 = scmp.lt.s32.totalorder %s11, 5
      // Predicated region
      $region13: #{tpu_custom_call.1} parent=5 // pred_check
        %p99 = pneg %p98
      $region14: #{tpu_custom_call.1} parent=5 // pred_check_branch
        %101 = sbr.rel (%p99) target = $region16
      $region15: #{tpu_custom_call.1} parent=5 // pred_region
        // Predicated region
        $region17: #{tpu_custom_call.1} parent=15 // pred_check
          %p102 = pneg %p47
        $region18: #{tpu_custom_call.1} parent=15 // pred_check_branch
          %104 = sbr.rel (%p102) target = $region20
        $region19: #{tpu_custom_call.1} parent=15 // pred_region
          %s105 = smul.u32 %s18, 5
          %s106 = sadd.s32 %s105, %s19
          %s107 = smul.u32 4, %s106
          %p108 = scmp.lt.s32.totalorder %s107, 19
          %s109 = scalar_select %p108, %s107, 19
          %s110 = smul.addr %s109, 8
          %s111 = scalar_lea.vmem %s0, %s110
          %s112 = smul.u32 %s18, 5
          %s113 = sadd.s32 %s112, %s19
          %s114 = smul.u32 4, %s113
        $region20: #{tpu_custom_call.1} parent=15 // pred_fallthru
          _
      $region16: #{tpu_custom_call.1} parent=5 // pred_fallthru
        _
      %p115 = scmp.le.s32.totalorder 1, %s11
      %p116 = scmp.lt.s32.totalorder %s11, 6
      %p117 = pnand %p115, %p116
      %p118 = pneg %p117
      // Predicated region
      $region21: #{tpu_custom_call.1} parent=5 // pred_check
        _
      $region22: #{tpu_custom_call.1} parent=5 // pred_check_branch
        %120 = sbr.rel (%p117) target = $region24
      $region23: #{tpu_custom_call.1} parent=5 // pred_region
        %s121 = ssub.s32 %s11, 1
        %s122 = smul.u32 %s20, 5
        %s123 = sadd.s32 %s122, %s21
        %s124 = smul.u32 4, %s123
        %p125 = scmp.lt.s32.totalorder %s124, 19
        %s126 = scalar_select %p125, %s124, 19
        %s127 = smul.addr %s126, 8
        %s128 = scalar_lea.vmem %s0, %s127
        %p129 = pneg %p53
        %p130 = pneg %p50
        %p131 = pneg %p83
        %p132 = pneg %p80
        %s133 = sand.u32 %s70, 1
        %s134 = scalar_lea.sflag [#allocation5], %s133
        %s135 = sand.u32 %s70, 1
        %s136 = smul.addr %s135, 32
        %s137 = scalar_lea.vmem [#allocation4], %s136
        %s138 = smul.u32 %s20, 5
        %s139 = sadd.s32 %s138, %s21
        %s140 = smul.u32 4, %s139
        %p141 = scmp.lt.s32.totalorder %s140, 19
        %s142 = scalar_select %p141, %s140, 19
        %s143 = smul.addr %s142, 8
        %s144 = scalar_lea.vmem %s0, %s143
        %s145 = smul.u32 %s20, 5
        %s146 = sadd.s32 %s145, %s21
        %s147 = smul.u32 4, %s146
        %s148 = smul.u32 %s20, 5
        %s149 = sadd.s32 %s148, %s21
        %s150 = smul.u32 4, %s149
        %p151 = scmp.eq.s32.totalorder %s21, 0
        // Predicated region
        $region25: #{tpu_custom_call.1} parent=23 // pred_check
          %p152 = pneg %p151
        $region26: #{tpu_custom_call.1} parent=23 // pred_check_branch
          %154 = sbr.rel (%p152) target = $region28
        $region27: #{tpu_custom_call.1} parent=23 // pred_region
          // Predicated region
          $region29: #{tpu_custom_call.1} parent=27 // pred_check
            _
          $region30: #{tpu_custom_call.1} parent=27 // pred_check_branch
            %156 = sbr.rel target = $region32
          $region31: #{tpu_custom_call.1} parent=27 // pred_region
            %157 = sst [smem:[#allocation8]] [#allocation7]
            %158 = sst [smem:[#allocation9]] [#allocation6]
          $region32: #{tpu_custom_call.1} parent=27 // pred_fallthru
            _
          %160 = shalt.err (0)
          %s162 = sshll.u32 %s1, 4
          %s163 = int_to_ptr.hbm [resolvable:$true] %s162
          %s164 = sshll.u32 [#allocation2], 4
          %s165 = int_to_ptr.vmem [resolvable:$true] %s164
          %167 = dma.hbm_to_vmem [thread:$0]  %s163, 8192, %s165, [#allocation3]
          %s168 = smul.u32 512, 1
          %s169 = sshll.u32 %s168, 4
          %170 = dma.done [#allocation3], %s169
        $region28: #{tpu_custom_call.1} parent=23 // pred_fallthru
          _
        %v171 = vld [vmem:[%s144] sm:$0xff]
        %v172 = vld [vmem:[%s144 + $0x8] sm:$0xff]
        %v173 = vld [vmem:[%s144 + $0x10] sm:$0xff]
        %v174 = vld [vmem:[%s144 + $0x18] sm:$0xff]
        %v175 = vlaneseq
        %v176 = vand.u32 %v175, 127
        %v177 = vadd.s32 %v176, 128
        %v178 = vadd.s32 %v176, 256
        %v179 = vadd.s32 %v176, 384
        %180 = vset.pattern.permute.xlu0 0
        %181 = vperm.xlu0 %180, %v171
        %v182 = vpop.permute.xlu0 %181
        %183 = vset.pattern.permute.xlu0 0
        %184 = vperm.xlu0 %183, %v172
        %v185 = vpop.permute.xlu0 %184
        %186 = vset.pattern.permute.xlu0 0
        %187 = vperm.xlu0 %186, %v173
        %v188 = vpop.permute.xlu0 %187
        %189 = vset.pattern.permute.xlu0 0
        %190 = vperm.xlu0 %189, %v174
        %v191 = vpop.permute.xlu0 %190
        %vm192 = vcmp.eq.s32.totalorder %v182, %v176
        %vm193 = vcmp.eq.s32.totalorder %v182, %v177
        %vm194 = vcmp.eq.s32.totalorder %v182, %v178
        %vm195 = vcmp.eq.s32.totalorder %v182, %v179
        %vm196 = vcmp.eq.s32.totalorder %v185, %v176
        %vm197 = vcmp.eq.s32.totalorder %v185, %v177
        %vm198 = vcmp.eq.s32.totalorder %v185, %v178
        %vm199 = vcmp.eq.s32.totalorder %v185, %v179
        %vm200 = vcmp.eq.s32.totalorder %v188, %v176
        %vm201 = vcmp.eq.s32.totalorder %v188, %v177
        %vm202 = vcmp.eq.s32.totalorder %v188, %v178
        %vm203 = vcmp.eq.s32.totalorder %v188, %v179
        %vm204 = vcmp.eq.s32.totalorder %v191, %v176
        %vm205 = vcmp.eq.s32.totalorder %v191, %v177
        %vm206 = vcmp.eq.s32.totalorder %v191, %v178
        %vm207 = vcmp.eq.s32.totalorder %v191, %v179
        %v208 = vsel %vm192, 1, 0
        %v209 = vsel %vm193, 1, 0
        %v210 = vsel %vm194, 1, 0
        %v211 = vsel %vm195, 1, 0
        %v212 = vsel %vm196, 1, 0
        %v213 = vsel %vm197, 1, 0
        %v214 = vsel %vm198, 1, 0
        %v215 = vsel %vm199, 1, 0
        %v216 = vsel %vm200, 1, 0
        %v217 = vsel %vm201, 1, 0
        %v218 = vsel %vm202, 1, 0
        %v219 = vsel %vm203, 1, 0
        %v220 = vsel %vm204, 1, 0
        %v221 = vsel %vm205, 1, 0
        %v222 = vsel %vm206, 1, 0
        %v223 = vsel %vm207, 1, 0
        %v224 = vcvt.s32.f32 %v208
        %v225 = vcvt.s32.f32 %v209
        %v226 = vcvt.s32.f32 %v210
        %v227 = vcvt.s32.f32 %v211
        %v228 = vcvt.s32.f32 %v212
        %v229 = vcvt.s32.f32 %v213
        %v230 = vcvt.s32.f32 %v214
        %v231 = vcvt.s32.f32 %v215
        %v232 = vcvt.s32.f32 %v216
        %v233 = vcvt.s32.f32 %v217
        %v234 = vcvt.s32.f32 %v218
        %v235 = vcvt.s32.f32 %v219
        %v236 = vcvt.s32.f32 %v220
        %v237 = vcvt.s32.f32 %v221
        %v238 = vcvt.s32.f32 %v222
        %v239 = vcvt.s32.f32 %v223
        %v240 = vld [vmem:[#allocation2] sm:$0xff]
        %v241 = vld [vmem:[#allocation2 + $0x8] sm:$0xff]
        %v242 = vld [vmem:[#allocation2 + $0x10] sm:$0xff]
        %v243 = vld [vmem:[#allocation2 + $0x18] sm:$0xff]
        %v244 = vld [vmem:[#allocation2 + $0x20] sm:$0xff]
        %v245 = vld [vmem:[#allocation2 + $0x28] sm:$0xff]
        %v246 = vld [vmem:[#allocation2 + $0x30] sm:$0xff]
        %v247 = vld [vmem:[#allocation2 + $0x38] sm:$0xff]
        %v248 = vld [vmem:[#allocation2 + $0x40] sm:$0xff]
        %v249 = vld [vmem:[#allocation2 + $0x48] sm:$0xff]
        %v250 = vld [vmem:[#allocation2 + $0x50] sm:$0xff]
        %v251 = vld [vmem:[#allocation2 + $0x58] sm:$0xff]
        %v252 = vld [vmem:[#allocation2 + $0x60] sm:$0xff]
        %v253 = vld [vmem:[#allocation2 + $0x68] sm:$0xff]
        %v254 = vld [vmem:[#allocation2 + $0x70] sm:$0xff]
        %v255 = vld [vmem:[#allocation2 + $0x78] sm:$0xff]
        %v256 = vld [vmem:[#allocation2 + $0x80] sm:$0xff]
        %v257 = vld [vmem:[#allocation2 + $0x88] sm:$0xff]
        %v258 = vld [vmem:[#allocation2 + $0x90] sm:$0xff]
        %v259 = vld [vmem:[#allocation2 + $0x98] sm:$0xff]
        %v260 = vld [vmem:[#allocation2 + $0xa0] sm:$0xff]
        %v261 = vld [vmem:[#allocation2 + $0xa8] sm:$0xff]
        %v262 = vld [vmem:[#allocation2 + $0xb0] sm:$0xff]
        %v263 = vld [vmem:[#allocation2 + $0xb8] sm:$0xff]
        %v264 = vld [vmem:[#allocation2 + $0xc0] sm:$0xff]
        %v265 = vld [vmem:[#allocation2 + $0xc8] sm:$0xff]
        %v266 = vld [vmem:[#allocation2 + $0xd0] sm:$0xff]
        %v267 = vld [vmem:[#allocation2 + $0xd8] sm:$0xff]
        %v268 = vld [vmem:[#allocation2 + $0xe0] sm:$0xff]
        %v269 = vld [vmem:[#allocation2 + $0xe8] sm:$0xff]
        %v270 = vld [vmem:[#allocation2 + $0xf0] sm:$0xff]
        %v271 = vld [vmem:[#allocation2 + $0xf8] sm:$0xff]
        %v272 = vld [vmem:[#allocation2 + $0x100] sm:$0xff]
        %v273 = vld [vmem:[#allocation2 + $0x108] sm:$0xff]
        %v274 = vld [vmem:[#allocation2 + $0x110] sm:$0xff]
        %v275 = vld [vmem:[#allocation2 + $0x118] sm:$0xff]
        %v276 = vld [vmem:[#allocation2 + $0x120] sm:$0xff]
        %v277 = vld [vmem:[#allocation2 + $0x128] sm:$0xff]
        %v278 = vld [vmem:[#allocation2 + $0x130] sm:$0xff]
        %v279 = vld [vmem:[#allocation2 + $0x138] sm:$0xff]
        %v280 = vld [vmem:[#allocation2 + $0x140] sm:$0xff]
        %v281 = vld [vmem:[#allocation2 + $0x148] sm:$0xff]
        %v282 = vld [vmem:[#allocation2 + $0x150] sm:$0xff]
        %v283 = vld [vmem:[#allocation2 + $0x158] sm:$0xff]
        %v284 = vld [vmem:[#allocation2 + $0x160] sm:$0xff]
        %v285 = vld [vmem:[#allocation2 + $0x168] sm:$0xff]
        %v286 = vld [vmem:[#allocation2 + $0x170] sm:$0xff]
        %v287 = vld [vmem:[#allocation2 + $0x178] sm:$0xff]
        %v288 = vld [vmem:[#allocation2 + $0x180] sm:$0xff]
        %v289 = vld [vmem:[#allocation2 + $0x188] sm:$0xff]
        %v290 = vld [vmem:[#allocation2 + $0x190] sm:$0xff]
        %v291 = vld [vmem:[#allocation2 + $0x198] sm:$0xff]
        %v292 = vld [vmem:[#allocation2 + $0x1a0] sm:$0xff]
        %v293 = vld [vmem:[#allocation2 + $0x1a8] sm:$0xff]
        %v294 = vld [vmem:[#allocation2 + $0x1b0] sm:$0xff]
        %v295 = vld [vmem:[#allocation2 + $0x1b8] sm:$0xff]
        %v296 = vld [vmem:[#allocation2 + $0x1c0] sm:$0xff]
        %v297 = vld [vmem:[#allocation2 + $0x1c8] sm:$0xff]
        %v298 = vld [vmem:[#allocation2 + $0x1d0] sm:$0xff]
        %v299 = vld [vmem:[#allocation2 + $0x1d8] sm:$0xff]
        %v300 = vld [vmem:[#allocation2 + $0x1e0] sm:$0xff]
        %v301 = vld [vmem:[#allocation2 + $0x1e8] sm:$0xff]
        %v302 = vld [vmem:[#allocation2 + $0x1f0] sm:$0xff]
        %v303 = vld [vmem:[#allocation2 + $0x1f8] sm:$0xff]
        %304 = vmatpush.msra.mxu0 %v255
        %305 = vmatpush.msra.mxu0 %v254
        %306 = vmatpush.msra.mxu0 %v253
        %307 = vmatpush.msra.mxu0 %v252
        %308 = vmatpush.msra.mxu0 %v251
        %309 = vmatpush.msra.mxu0 %v250
        %310 = vmatpush.msra.mxu0 %v249
        %311 = vmatpush.msra.mxu0 %v248
        %312 = vmatpush.msra.mxu0 %v247
        %313 = vmatpush.msra.mxu0 %v246
        %314 = vmatpush.msra.mxu0 %v245
        %315 = vmatpush.msra.mxu0 %v244
        %316 = vmatpush.msra.mxu0 %v243
        %317 = vmatpush.msra.mxu0 %v242
        %318 = vmatpush.msra.mxu0 %v241
        %319 = vmatpush.msra.mxu0 %v240
        %320 = vmatmul.f32.gmra.mxu0 %v224
        %v321 = vpop.f32.mrf.mxu0
        %v322 = vadd.f32 0.0, %v321
        %323 = vmatmul.f32.gmra.mxu0 %v228
        %v324 = vpop.f32.mrf.mxu0
        %v325 = vadd.f32 0.0, %v324
        %326 = vmatmul.f32.gmra.mxu0 %v232
        %v327 = vpop.f32.mrf.mxu0
        %v328 = vadd.f32 0.0, %v327
        %329 = vmatmul.f32.gmra.mxu0 %v236
        %v330 = vpop.f32.mrf.mxu0
        %v331 = vadd.f32 0.0, %v330
        %332 = vdwg.mxu0
        %333 = vmatpush.msra.mxu0 %v271
        %334 = vmatpush.msra.mxu0 %v270
        %335 = vmatpush.msra.mxu0 %v269
        %336 = vmatpush.msra.mxu0 %v268
        %337 = vmatpush.msra.mxu0 %v267
        %338 = vmatpush.msra.mxu0 %v266
        %339 = vmatpush.msra.mxu0 %v265
        %340 = vmatpush.msra.mxu0 %v264
        %341 = vmatpush.msra.mxu0 %v263
        %342 = vmatpush.msra.mxu0 %v262
        %343 = vmatpush.msra.mxu0 %v261
        %344 = vmatpush.msra.mxu0 %v260
        %345 = vmatpush.msra.mxu0 %v259
        %346 = vmatpush.msra.mxu0 %v258
        %347 = vmatpush.msra.mxu0 %v257
        %348 = vmatpush.msra.mxu0 %v256
        %349 = vmatmul.f32.gmra.mxu0 %v225
        %v350 = vpop.f32.mrf.mxu0
        %v351 = vadd.f32 %v322, %v350
        %352 = vmatmul.f32.gmra.mxu0 %v229
        %v353 = vpop.f32.mrf.mxu0
        %v354 = vadd.f32 %v325, %v353
        %355 = vmatmul.f32.gmra.mxu0 %v233
        %v356 = vpop.f32.mrf.mxu0
        %v357 = vadd.f32 %v328, %v356
        %358 = vmatmul.f32.gmra.mxu0 %v237
        %v359 = vpop.f32.mrf.mxu0
        %v360 = vadd.f32 %v331, %v359
        %361 = vdwg.mxu0
        %362 = vmatpush.msra.mxu0 %v287
        %363 = vmatpush.msra.mxu0 %v286
        %364 = vmatpush.msra.mxu0 %v285
        %365 = vmatpush.msra.mxu0 %v284
        %366 = vmatpush.msra.mxu0 %v283
        %367 = vmatpush.msra.mxu0 %v282
        %368 = vmatpush.msra.mxu0 %v281
        %369 = vmatpush.msra.mxu0 %v280
        %370 = vmatpush.msra.mxu0 %v279
        %371 = vmatpush.msra.mxu0 %v278
        %372 = vmatpush.msra.mxu0 %v277
        %373 = vmatpush.msra.mxu0 %v276
        %374 = vmatpush.msra.mxu0 %v275
        %375 = vmatpush.msra.mxu0 %v274
        %376 = vmatpush.msra.mxu0 %v273
        %377 = vmatpush.msra.mxu0 %v272
        %378 = vmatmul.f32.gmra.mxu0 %v226
        %v379 = vpop.f32.mrf.mxu0
        %v380 = vadd.f32 %v351, %v379
        %381 = vmatmul.f32.gmra.mxu0 %v230
        %v382 = vpop.f32.mrf.mxu0
        %v383 = vadd.f32 %v354, %v382
        %384 = vmatmul.f32.gmra.mxu0 %v234
        %v385 = vpop.f32.mrf.mxu0
        %v386 = vadd.f32 %v357, %v385
        %387 = vmatmul.f32.gmra.mxu0 %v238
        %v388 = vpop.f32.mrf.mxu0
        %v389 = vadd.f32 %v360, %v388
        %390 = vdwg.mxu0
        %391 = vmatpush.msra.mxu0 %v303
        %392 = vmatpush.msra.mxu0 %v302
        %393 = vmatpush.msra.mxu0 %v301
        %394 = vmatpush.msra.mxu0 %v300
        %395 = vmatpush.msra.mxu0 %v299
        %396 = vmatpush.msra.mxu0 %v298
        %397 = vmatpush.msra.mxu0 %v297
        %398 = vmatpush.msra.mxu0 %v296
        %399 = vmatpush.msra.mxu0 %v295
        %400 = vmatpush.msra.mxu0 %v294
        %401 = vmatpush.msra.mxu0 %v293
        %402 = vmatpush.msra.mxu0 %v292
        %403 = vmatpush.msra.mxu0 %v291
        %404 = vmatpush.msra.mxu0 %v290
        %405 = vmatpush.msra.mxu0 %v289
        %406 = vmatpush.msra.mxu0 %v288
        %407 = vmatmul.f32.gmra.mxu0 %v227
        %v408 = vpop.f32.mrf.mxu0
        %v409 = vadd.f32 %v380, %v408
        %410 = vmatmul.f32.gmra.mxu0 %v231
        %v411 = vpop.f32.mrf.mxu0
        %v412 = vadd.f32 %v383, %v411
        %413 = vmatmul.f32.gmra.mxu0 %v235
        %v414 = vpop.f32.mrf.mxu0
        %v415 = vadd.f32 %v386, %v414
        %416 = vmatmul.f32.gmra.mxu0 %v239
        %v417 = vpop.f32.mrf.mxu0
        %v418 = vadd.f32 %v389, %v417
        %419 = vdwg.mxu0
        %v420 = vmul.f32 %v409, 11.313708
        %v421 = vmul.f32 %v412, 11.313708
        %v422 = vmul.f32 %v415, 11.313708
        %v423 = vmul.f32 %v418, 11.313708
        %424 = vst [vmem:[%s137] sm:$0xff] %v420
        %425 = vst [vmem:[%s137 + $0x8] sm:$0xff] %v421
        %426 = vst [vmem:[%s137 + $0x10] sm:$0xff] %v422
        %427 = vst [vmem:[%s137 + $0x18] sm:$0xff] %v423
        %s428 = sand.u32 %s70, 1
        %s429 = scalar_lea.sflag [#allocation5], %s428
        %s430 = sand.u32 %s70, 1
        %s431 = smul.addr %s430, 32
        %s432 = scalar_lea.vmem [#allocation4], %s431
        // Predicated region
        $region33: #{tpu_custom_call.1} parent=23 // pred_check
          %p433 = pneg %p80
        $region34: #{tpu_custom_call.1} parent=23 // pred_check_branch
          %435 = sbr.rel (%p433) target = $region36
        $region35: #{tpu_custom_call.1} parent=23 // pred_region
          %s436 = smul.u32 %s20, 5
          %s437 = sadd.s32 %s436, %s21
          %s438 = smul.u32 4, %s437
          %440 = vsyncadd %s429, 0
          %s441 = smul.addr %s438, 8
          %s442 = scalar_lea.hbm %s2, %s441
          %s443 = sshll.u32 %s432, 4
          %s444 = int_to_ptr.vmem [resolvable:$true] %s443
          %s445 = sshll.u32 %s442, 4
          %s446 = int_to_ptr.hbm [resolvable:$true] %s445
          %451 = dma.vmem_to_hbm [thread:$0]  %s444, 512, %s446, %s429, 128, 128, 8
        $region36: #{tpu_custom_call.1} parent=23 // pred_fallthru
          _
      $region24: #{tpu_custom_call.1} parent=5 // pred_fallthru
        _
      %p452 = scmp.le.s32.totalorder 2, %s11
      // Predicated region
      $region37: #{tpu_custom_call.1} parent=5 // pred_check
        %p453 = pneg %p452
      $region38: #{tpu_custom_call.1} parent=5 // pred_check_branch
        %455 = sbr.rel (%p453) target = $region40
      $region39: #{tpu_custom_call.1} parent=5 // pred_region
        %s456 = ssub.s32 %s11, 2
        // Predicated region
        $region41: #{tpu_custom_call.1} parent=39 // pred_check
          %p457 = pneg %p86
        $region42: #{tpu_custom_call.1} parent=39 // pred_check_branch
          %459 = sbr.rel (%p457) target = $region44
        $region43: #{tpu_custom_call.1} parent=39 // pred_region
          %s460 = sand.u32 %s71, 1
          %s461 = scalar_lea.sflag [#allocation5], %s460
          %s462 = sand.u32 %s71, 1
          %s463 = smul.addr %s462, 32
          %s464 = scalar_lea.vmem [#allocation4], %s463
          %466 = dma.done %s461, 512
        $region44: #{tpu_custom_call.1} parent=39 // pred_fallthru
          _
      $region40: #{tpu_custom_call.1} parent=5 // pred_fallthru
        _
    $region6: #{tpu_custom_call.1} parent=1 // loop_footer
      %s15 = sadd.s32 1, %s11
    $region7: #{tpu_custom_call.1} parent=1 // loop_footer_branch
      %10 = sbr.rel target = $region3
    $region8: #{tpu_custom_call.1} parent=1 // loop_exit
      _
    %467 = vsyncpa [#allocation5], 1
    %s468 = scalar_lea.sflag [#allocation5], 1
    %469 = vsyncpa %s468, 1
  %470 = vsyncmov [#allocation3]
  %s471 = vpop.sfrf %470
  %p472 = scmp.eq.s32.totalorder %s471, 0
  %p473 = pneg %p472
  %475 = shalt.err (%p473)

</llo_original>
